<compile_context>
chip_gen: v7x
topology: tpu7x:2x2x1
jax: 0.10.0
libtpu: 0.0.40
codegen_flags: <defaults>
</compile_context>

<pallas_src>
import jax
import jax.numpy as jnp
from jax.experimental import pallas as pl
from jax.experimental.pallas import tpu as pltpu

DEFAULT_EPS = 0.5
DEFAULT_B = 3.0


def _round_up(x, m):
    return ((x + m - 1) // m) * m


def _vmem_capacity_bytes():
    """Physical VMEM of the current TPU generation (conservative fallback: v7x's 64 MiB)."""
    try:
        cap = int(pltpu.get_tpu_info().vmem_capacity_bytes)
        if cap > 0:
            return cap
    except Exception:
        pass
    return 64 << 20


def _pick_block_rows(n, d, itemsize, *, xs_budget_bytes, target_tile_bytes=4 << 20):
    """Row-tile size (multiple of 128).

    Targets ~`target_tile_bytes` of lane-padded xs data per tile (amortizes the ~0.35 us
    per-grid-step overhead), capped so the two in-flight (double-buffered) tiles fit
    `xs_budget_bytes`.  The VMEM footprint uses round_up(d, 128) since lanes are padded.
    """
    d_pad = _round_up(max(int(d), 1), 128)
    row_bytes = d_pad * itemsize
    tn = max(target_tile_bytes, row_bytes) // row_bytes
    tn = min(tn, max(xs_budget_bytes // (2 * row_bytes), 128))
    tn = max((tn // 128) * 128, 128)
    # Never tile beyond the data; keep >=2 grid steps for large N so the row axis can be
    # sharded across v7x's two TensorCores and the DMA pipeline has more than one stage.
    tn = min(tn, _round_up(max(n, 1), 128))
    if n > 128:
        tn = min(tn, _round_up(-(-n // 2), 128))
    return tn


def lt_kernel(c_ref, w_ref, xs_ref, out_ref):
    # c_ref  : SMEM (1,) f32  = -B * (bias + eps)
    # w_ref  : VMEM (1, D) f32 = -B * w   (resident across the grid: constant index_map)
    # xs_ref : VMEM (TN, D)    row tile of xs (f32 or bf16 stream)
    # out_ref: VMEM (1, TN)    lane-dense fuzzy truth values for this row tile
    xs = xs_ref[...].astype(jnp.float32)          # no-op for f32; VPU upcast for bf16 stream
    z = jax.lax.dot_general(
        w_ref[...], xs,
        dimension_numbers=(((1,), (1,)), ((), ())),   # contract D with D (trans-B dot)
        preferred_element_type=jnp.float32,
        precision=jax.lax.Precision.HIGHEST,          # exact-ish f32; MXU passes hidden by DMA
    )                                                 # (1, TN)
    # lt(expr) = 1 - sigmoid(B*(expr+eps)) = sigmoid(-B*expr - B*(bias+eps)) = sigmoid(z + c)
    out_ref[...] = jax.nn.sigmoid(z + c_ref[0])


def lt_forward(xs, w, bias, B=DEFAULT_B, eps=DEFAULT_EPS, *, block_rows=None):
    """Pallas implementation of Lt(LinearExpr).forward(xs). Returns shape (N,) f32.

    xs is streamed in its existing dtype (pass a bf16 array produced upstream to halve HBM
    bytes -- no cast pass is inserted here).  w / bias / B / eps stay in f32.
    """
    xs = jnp.asarray(xs)
    N, D = xs.shape
    in_itemsize = jnp.dtype(xs.dtype).itemsize

    w_flat = jnp.asarray(w, dtype=jnp.float32).reshape(-1)
    assert w_flat.shape[0] == D

    # Host-side folding of B / eps / bias (w stays f32 -- never quantized).
    w_scaled = (-B * w_flat).reshape(1, D)
    c = jnp.reshape(jnp.asarray(-B * (bias + eps), dtype=jnp.float32), (1,))

    # Per-generation VMEM budget for the double-buffered xs tiles.
    vmem_cap = _vmem_capacity_bytes()
    xs_budget = (24 << 20) if vmem_cap <= (64 << 20) else (48 << 20)

    if block_rows is None:
        tn = _pick_block_rows(N, D, in_itemsize, xs_budget_bytes=xs_budget)
    else:
        tn = max(128, _round_up(int(block_rows), 128))
    grid_n = pl.cdiv(N, tn)                           # ragged last block handled by Pallas

    # Explicit scoped-VMEM limit sized from the actual (lane-padded, double-buffered) tiles.
    d_pad = _round_up(D, 128)
    xs_tiles_bytes = 2 * tn * d_pad * in_itemsize
    out_tiles_bytes = 2 * 8 * tn * 4                  # (1, tn) f32 blocks, sublane-padded
    vmem_limit = int(min(vmem_cap,
                         max(32 << 20, xs_tiles_bytes + out_tiles_bytes + (8 << 20))))

    cost = pl.CostEstimate(
        flops=2 * N * D + 2 * N,
        transcendentals=N,
        bytes_accessed=N * D * in_itemsize + D * 4 + N * 4,
    )

    out = pl.pallas_call(
        lt_kernel,
        out_shape=jax.ShapeDtypeStruct((1, N), jnp.float32),
        grid=(grid_n,),
        in_specs=[
            pl.BlockSpec(memory_space=pltpu.MemorySpace.SMEM),       # c: folded scalar
            pl.BlockSpec((1, D), lambda i: (0, 0)),                  # w_scaled (resident)
            # If profiling ever shows exposed DMA at step boundaries, add
            # pipeline_mode=pl.Buffered(3) here.
            pl.BlockSpec((tn, D), lambda i: (i, 0)),                 # xs row tile
        ],
        out_specs=pl.BlockSpec((1, tn), lambda i: (0, i)),           # lane-dense output
        compiler_params=pltpu.CompilerParams(
            dimension_semantics=("parallel",),
            vmem_limit_bytes=vmem_limit,
        ),
        cost_estimate=cost,
    )(c, w_scaled, xs)

    return out.reshape(N)


def lt_reference(xs, w, bias, B=DEFAULT_B, eps=DEFAULT_EPS):
    # Exact-f32 reference (VPU multiply + sum).
    expr = jnp.sum(jnp.asarray(xs, jnp.float32) * w[None, :], axis=-1) + bias
    return 1.0 - jax.nn.sigmoid(B * (expr + eps))


if __name__ == "__main__":
    # Deterministic synthetic parameters/inputs (no checkpoint loading).
    N, D = 300, 32                      # 300 samples (non-multiple of the tile), 32 variables
    key = jax.random.PRNGKey(0)
    k_xs, k_w = jax.random.split(key)
    xs = jax.random.normal(k_xs, (N, D), dtype=jnp.float32)
    w = jax.random.normal(k_w, (D,), dtype=jnp.float32) * 0.1   # linear-expr coefficients
    bias = 0.1                                                   # linear-expr constant term

    ref = lt_reference(xs, w, bias)

    # Auto-tiled f32 path: >=2 grid steps, ragged last block, no host-side padding.
    out_f32 = jax.block_until_ready(lt_forward(xs, w, bias))
    assert out_f32.shape == (N,)
    assert jnp.allclose(out_f32, ref, atol=2e-2, rtol=0.0)      # typically ~1e-6 with HIGHEST

    # Explicit small tile -> 3-step pipelined grid exercising the ragged tail block.
    out_small = jax.block_until_ready(lt_forward(xs, w, bias, block_rows=128))
    assert out_small.shape == (N,)
    assert jnp.allclose(out_small, ref, atol=2e-2, rtol=0.0)

    # bf16-streamed path: xs already lives in bf16 "upstream" (no extra HBM cast pass inside
    # lt_forward); w stays f32 and accumulation + sigmoid run in f32 inside the kernel.
    xs_bf16 = xs.astype(jnp.bfloat16)
    out_bf16 = jax.block_until_ready(lt_forward(xs_bf16, w, bias))
    assert out_bf16.shape == (N,)
    assert jnp.allclose(out_bf16, ref, atol=2e-2, rtol=0.0)

    print("KERNEL_OK")
</pallas_src>

<mosaic_0001>
module attributes {stable_mosaic.version = 11 : i64} {
  func.func @lt_kernel(%arg0: i32, %arg1: memref<1xf32, #tpu.memory_space<smem>>, %arg2: memref<1x32xf32, #tpu.memory_space<vmem>>, %arg3: memref<256x32xf32, #tpu.memory_space<vmem>>, %arg4: memref<1x256xf32, #tpu.memory_space<vmem>>) attributes {dimension_semantics = [#tpu.dimension_semantics<parallel>], iteration_bounds = array<i64: 2>, scalar_prefetch = 0 : i64, scratch_operands = 0 : i64, tpu.core_type = #tpu.core_type<tc>, window_params = [{transform_indices = @transform_0, window_bounds = array<i64: 1>}, {pipeline_mode = #tpu.pipeline_mode<synchronous>, transform_indices = @transform_1, window_bounds = array<i64: 1, 32>}, {transform_indices = @transform_2, window_bounds = array<i64: 256, 32>}, {transform_indices = @transform_3, window_bounds = array<i64: 1, 256>}]} {
    %c0 = arith.constant 0 : index
    %c0_0 = arith.constant 0 : index
    %0 = vector.load %arg3[%c0, %c0_0] : memref<256x32xf32, #tpu.memory_space<vmem>>, vector<256x32xf32>
    %c0_1 = arith.constant 0 : index
    %c0_2 = arith.constant 0 : index
    %1 = vector.load %arg2[%c0_1, %c0_2] : memref<1x32xf32, #tpu.memory_space<vmem>>, vector<1x32xf32>
    %cst = arith.constant dense<0.000000e+00> : vector<1x256xf32>
    %2 = tpu.matmul %1, %0, %cst {dimension_numbers = #tpu.dot_dimension_numbers<[1], [1], [0], [0], [0, 0, 1, 0], [], []>, precision = #tpu.contract_precision<fp32>} : vector<1x32xf32>, vector<256x32xf32>, vector<1x256xf32> -> vector<1x256xf32>
    %c0_3 = arith.constant 0 : index
    %3 = memref.load %arg1[%c0_3] : memref<1xf32, #tpu.memory_space<smem>>
    %4 = vector.broadcast %3 : f32 to vector<1x256xf32>
    %5 = arith.addf %2, %4 : vector<1x256xf32>
    %6 = arith.negf %5 : vector<1x256xf32>
    %7 = math.exp %6 : vector<1x256xf32>
    %cst_4 = arith.constant 1.000000e+00 : f32
    %8 = vector.broadcast %cst_4 : f32 to vector<1x256xf32>
    %9 = arith.addf %8, %7 : vector<1x256xf32>
    %10 = arith.divf %8, %9 : vector<1x256xf32>
    %c0_5 = arith.constant 0 : index
    %c0_6 = arith.constant 0 : index
    %11 = vector.load %arg4[%c0_5, %c0_6] : memref<1x256xf32, #tpu.memory_space<vmem>>, vector<1x256xf32>
    tpu.vector_store %arg4[%c0_5, %c0_6], %10 {strides = array<i32>} : memref<1x256xf32, #tpu.memory_space<vmem>>, vector<1x256xf32>,
    return
  }
  func.func @transform_0(%arg0: i32) -> i32 {
    %c0_i32 = arith.constant 0 : i32
    %c0_i32_0 = arith.constant 0 : i32
    return %c0_i32 : i32
  }
  func.func @transform_1(%arg0: i32) -> (i32, i32) {
    %c0_i32 = arith.constant 0 : i32
    %c0_i32_0 = arith.constant 0 : i32
    %c0_i32_1 = arith.constant 0 : i32
    return %c0_i32, %c0_i32_0 : i32, i32
  }
  func.func @transform_2(%arg0: i32) -> (i32, i32) {
    %c0_i32 = arith.constant 0 : i32
    %c0_i32_0 = arith.constant 0 : i32
    return %arg0, %c0_i32 : i32, i32
  }
  func.func @transform_3(%arg0: i32) -> (i32, i32) {
    %c0_i32 = arith.constant 0 : i32
    %c0_i32_0 = arith.constant 0 : i32
    return %c0_i32, %arg0 : i32, i32
  }
}

</mosaic_0001>

<llo_original>
// kernel: tpu_custom_call.1
$region0: #{tpu_custom_call.1}
  #allocation0 [shape = 'u32[]', space=smem, size = 0x4, offset = 0x4, fixed_abs, tag = 'smem constant byte address 0x4 - core index']
  #allocation1 [shape = 'u32[144,128]{1,0:T(1,128)}', space=vmem, size = 0x12000, scoped, tag = 'internal scratch']
  #allocation2 [shape = 'f32[1]{0:T(128)S(6)}', space=smem, size = 0x200, scoped, tag = 'scoped memory for tpu_custom_call.1']
  %s0 = inlined_call_operand.<no memory space> [shape: f32[1], index: 0, kind: input, shape index: {}]
  %s1 = inlined_call_operand.vmem [shape: f32[1,32], index: 1, kind: input, shape index: {}]
  %s2 = inlined_call_operand.vmem [shape: f32[300,32], index: 2, kind: input, shape index: {}]
  %s3 = inlined_call_operand.hbm [shape: f32[1,300], index: 3, kind: output, shape index: {}]
  %s4 = sld [smem:[#allocation0]]
  $region45: #{tpu_custom_call.1} parent=0
    _
  %s6 = ssub.s32 1, %s4
  %s7 = scalar_select 0, %s6, %s4
  %8 = sst [smem:[#allocation2]] %s0
  $region1: #{tpu_custom_call.1} parent=0
    #allocation3 [shape = 'u8[2048]{0}', space=vmem, size = 0x800, scoped, tag = 'output window, operand 0']
    #allocation4 [shape = 's32[2]{0}', space=sflag, size = 0x8, scoped, tag = 'scoped memory for tpu_custom_call.1']
    %9 = vsyncpa [#allocation4], 0
    %s10 = scalar_lea.sflag [#allocation4], 1
    %11 = vsyncpa %s10, 0
    loop: start=0, step=1, limit=4
    $region2: #{tpu_custom_call.1} parent=1 // loop_pre_header
      _
    $region3: #{tpu_custom_call.1} parent=1 // loop_header
      %s13 = sphi 0, %s17
      %p14 = scmp.ge.s32.totalorder %s13, 4
      %s21 = sphi 0, %s21
      %s23 = sphi 0, %s21
      %s24 = sphi 0, %s23
      %s38 = sphi 0, %s24
      %s42 = sphi 0, %s42
      %s44 = sphi 0, %s42
      %s45 = sphi 0, %s44
      %s59 = sphi 0, %s45
      %s65 = sphi 0, %s67
      %s68 = sphi 0, %s65
      %s69 = sphi 0, %s68
      %s85 = sphi 0, %s69
      %s91 = sphi 0, %s93
      %s94 = sphi 0, %s91
      %s95 = sphi 0, %s94
      %s111 = sphi 0, %s95
    $region4: #{tpu_custom_call.1} parent=1 // loop_header_branch
      %16 = sbr.rel (%p14) target = $region8
    $region5: #{tpu_custom_call.1} parent=1 // loop_body
      %s18 = ssub.s32 %s13, 1
      %s19 = ssub.s32 %s13, 2
      %s20 = sadd.s32 %s13, 1
      %s22 = sadd.s32 %s21, 1
      %p25 = scmp.eq.s32.totalorder %s13, 1
      %p26 = scmp.ne.s32.totalorder %s21, %s23
      %p27 = scmp.eq.s32.totalorder %s13, 0
      %p28 = por %p26, %p27
      %p29 = scmp.ne.s32.totalorder %s21, %s23
      %p30 = scmp.eq.s32.totalorder %s18, 1
      %p31 = por %p29, %p30
      %p32 = scmp.ne.s32.totalorder %s23, %s24
      %p33 = scmp.eq.s32.totalorder %s18, 0
      %p34 = por %p32, %p33
      %p35 = scmp.ne.s32.totalorder %s23, %s24
      %p36 = scmp.eq.s32.totalorder %s19, 1
      %p37 = por %p35, %p36
      %p39 = scmp.ne.s32.totalorder %s24, %s38
      %p40 = scmp.eq.s32.totalorder %s19, 0
      %p41 = por %p39, %p40
      %s43 = sadd.s32 %s42, 1
      %p46 = scmp.eq.s32.totalorder %s13, 1
      %p47 = scmp.ne.s32.totalorder %s42, %s44
      %p48 = scmp.eq.s32.totalorder %s13, 0
      %p49 = por %p47, %p48
      %p50 = scmp.ne.s32.totalorder %s42, %s44
      %p51 = scmp.eq.s32.totalorder %s18, 1
      %p52 = por %p50, %p51
      %p53 = scmp.ne.s32.totalorder %s44, %s45
      %p54 = scmp.eq.s32.totalorder %s18, 0
      %p55 = por %p53, %p54
      %p56 = scmp.ne.s32.totalorder %s44, %s45
      %p57 = scmp.eq.s32.totalorder %s19, 1
      %p58 = por %p56, %p57
      %p60 = scmp.ne.s32.totalorder %s45, %s59
      %p61 = scmp.eq.s32.totalorder %s19, 0
      %p62 = por %p60, %p61
      %s63 = ssub.s32 %s13, %s20
      %p64 = scmp.eq.s32.totalorder %s63, 0
      %s66 = sadd.s32 %s65, 1
      %s67 = scalar_select %p64, %s65, %s66
      %p70 = pneg %p64
      %p71 = scmp.eq.s32.totalorder %s13, 1
      %p72 = por %p70, %p71
      %p73 = scmp.ne.s32.totalorder %s65, %s68
      %p74 = scmp.eq.s32.totalorder %s13, 0
      %p75 = por %p73, %p74
      %p76 = scmp.ne.s32.totalorder %s65, %s68
      %p77 = scmp.eq.s32.totalorder %s18, 1
      %p78 = por %p76, %p77
      %p79 = scmp.ne.s32.totalorder %s68, %s69
      %p80 = scmp.eq.s32.totalorder %s18, 0
      %p81 = por %p79, %p80
      %p82 = scmp.ne.s32.totalorder %s68, %s69
      %p83 = scmp.eq.s32.totalorder %s19, 1
      %p84 = por %p82, %p83
      %p86 = scmp.ne.s32.totalorder %s69, %s85
      %p87 = scmp.eq.s32.totalorder %s19, 0
      %p88 = por %p86, %p87
      %s89 = ssub.s32 %s13, %s20
      %p90 = scmp.eq.s32.totalorder %s89, 0
      %s92 = sadd.s32 %s91, 1
      %s93 = scalar_select %p90, %s91, %s92
      %p96 = pneg %p90
      %p97 = scmp.eq.s32.totalorder %s13, 1
      %p98 = por %p96, %p97
      %p99 = scmp.ne.s32.totalorder %s91, %s94
      %p100 = scmp.eq.s32.totalorder %s13, 0
      %p101 = por %p99, %p100
      %p102 = scmp.ne.s32.totalorder %s91, %s94
      %p103 = scmp.eq.s32.totalorder %s18, 1
      %p104 = por %p102, %p103
      %p105 = scmp.ne.s32.totalorder %s94, %s95
      %p106 = scmp.eq.s32.totalorder %s18, 0
      %p107 = por %p105, %p106
      %p108 = scmp.ne.s32.totalorder %s94, %s95
      %p109 = scmp.eq.s32.totalorder %s19, 1
      %p110 = por %p108, %p109
      %p112 = scmp.ne.s32.totalorder %s95, %s111
      %p113 = scmp.eq.s32.totalorder %s19, 0
      %p114 = por %p112, %p113
      %p115 = scmp.le.s32.totalorder 1, %s13
      %p116 = scmp.lt.s32.totalorder %s13, 3
      %p117 = pnand %p115, %p116
      %p118 = pneg %p117
      // Predicated region
      $region9: #{tpu_custom_call.1} parent=5 // pred_check
        _
      $region10: #{tpu_custom_call.1} parent=5 // pred_check_branch
        %120 = sbr.rel (%p117) target = $region12
      $region11: #{tpu_custom_call.1} parent=5 // pred_region
        %s121 = ssub.s32 %s13, 1
        // Predicated region
        $region13: #{tpu_custom_call.1} parent=11 // pred_check
          %p122 = pneg %p34
        $region14: #{tpu_custom_call.1} parent=11 // pred_check_branch
          %124 = sbr.rel (%p122) target = $region16
        $region15: #{tpu_custom_call.1} parent=11 // pred_region
          _
        $region16: #{tpu_custom_call.1} parent=11 // pred_fallthru
          _
        // Predicated region
        $region17: #{tpu_custom_call.1} parent=11 // pred_check
          %p125 = pneg %p55
        $region18: #{tpu_custom_call.1} parent=11 // pred_check_branch
          %127 = sbr.rel (%p125) target = $region20
        $region19: #{tpu_custom_call.1} parent=11 // pred_region
          _
        $region20: #{tpu_custom_call.1} parent=11 // pred_fallthru
          _
      $region12: #{tpu_custom_call.1} parent=5 // pred_fallthru
        _
      %p128 = scmp.lt.s32.totalorder %s13, 2
      // Predicated region
      $region21: #{tpu_custom_call.1} parent=5 // pred_check
        %p129 = pneg %p128
      $region22: #{tpu_custom_call.1} parent=5 // pred_check_branch
        %131 = sbr.rel (%p129) target = $region24
      $region23: #{tpu_custom_call.1} parent=5 // pred_region
        // Predicated region
        $region25: #{tpu_custom_call.1} parent=23 // pred_check
          %p132 = pneg %p75
        $region26: #{tpu_custom_call.1} parent=23 // pred_check_branch
          %134 = sbr.rel (%p132) target = $region28
        $region27: #{tpu_custom_call.1} parent=23 // pred_region
          %s135 = smul.u32 32, %s13
          %s136 = ssub.s32 38, %s135
          %p137 = scmp.lt.s32.totalorder %s136, 32
          %s138 = scalar_select %p137, %s136, 32
          %s139 = smul.u32 128, %s138
          %p140 = scmp.lt.s32.totalorder %s135, 37
          %s141 = scalar_select %p140, %s135, 37
          %s142 = smul.addr %s141, 8
          %s143 = scalar_lea.vmem %s2, %s142
          %s144 = smul.u32 32, %s13
          %s145 = ssub.s32 38, %s144
          %p146 = scmp.lt.s32.totalorder %s145, 32
          %s147 = scalar_select %p146, %s145, 32
          %s148 = smul.u32 128, %s147
        $region28: #{tpu_custom_call.1} parent=23 // pred_fallthru
          _
      $region24: #{tpu_custom_call.1} parent=5 // pred_fallthru
        _
      %p149 = scmp.le.s32.totalorder 1, %s13
      %p150 = scmp.lt.s32.totalorder %s13, 3
      %p151 = pnand %p149, %p150
      %p152 = pneg %p151
      // Predicated region
      $region29: #{tpu_custom_call.1} parent=5 // pred_check
        _
      $region30: #{tpu_custom_call.1} parent=5 // pred_check_branch
        %154 = sbr.rel (%p151) target = $region32
      $region31: #{tpu_custom_call.1} parent=5 // pred_region
        %s155 = ssub.s32 %s13, 1
        %p156 = pneg %p34
        %p157 = pneg %p31
        %p158 = pneg %p55
        %p159 = pneg %p52
        %s160 = smul.u32 32, %s18
        %s161 = ssub.s32 38, %s160
        %p162 = scmp.lt.s32.totalorder %s161, 32
        %s163 = scalar_select %p162, %s161, 32
        %s164 = smul.u32 128, %s163
        %p165 = scmp.lt.s32.totalorder %s160, 37
        %s166 = scalar_select %p165, %s160, 37
        %s167 = smul.addr %s166, 8
        %s168 = scalar_lea.vmem %s2, %s167
        %p169 = pneg %p81
        %p170 = pneg %p78
        %p171 = pneg %p107
        %p172 = pneg %p104
        %s173 = sand.u32 %s94, 1
        %s174 = scalar_lea.sflag [#allocation4], %s173
        %s175 = sand.u32 %s94, 1
        %s176 = smul.addr %s175, 2
        %s177 = scalar_lea.vmem [#allocation3], %s176
        %s178 = smul.u32 32, %s18
        %s179 = ssub.s32 38, %s178
        %p180 = scmp.lt.s32.totalorder %s179, 32
        %s181 = scalar_select %p180, %s179, 32
        %s182 = smul.u32 128, %s181
        %p183 = scmp.lt.s32.totalorder %s178, 37
        %s184 = scalar_select %p183, %s178, 37
        %s185 = smul.addr %s184, 8
        %s186 = scalar_lea.vmem %s2, %s185
        %s187 = smul.u32 32, %s18
        %s188 = ssub.s32 38, %s187
        %p189 = scmp.lt.s32.totalorder %s188, 32
        %s190 = scalar_select %p189, %s188, 32
        %s191 = smul.u32 128, %s190
        %s192 = smul.u32 2, %s18
        %s193 = ssub.s32 3, %s192
        %p194 = scmp.lt.s32.totalorder %s193, 2
        %s195 = scalar_select %p194, %s193, 2
        %s196 = smul.u32 16, %s195
        %v197 = vld [vmem:[%s186] sm:$0xff]
        %v198 = vld [vmem:[%s186 + $0x8] sm:$0xff]
        %v199 = vld [vmem:[%s186 + $0x10] sm:$0xff]
        %v200 = vld [vmem:[%s186 + $0x18] sm:$0xff]
        %v201 = vld [vmem:[%s186 + $0x20] sm:$0xff]
        %v202 = vld [vmem:[%s186 + $0x28] sm:$0xff]
        %v203 = vld [vmem:[%s186 + $0x30] sm:$0xff]
        %v204 = vld [vmem:[%s186 + $0x38] sm:$0xff]
        %v205 = vld [vmem:[%s186 + $0x40] sm:$0xff]
        %v206 = vld [vmem:[%s186 + $0x48] sm:$0xff]
        %v207 = vld [vmem:[%s186 + $0x50] sm:$0xff]
        %v208 = vld [vmem:[%s186 + $0x58] sm:$0xff]
        %v209 = vld [vmem:[%s186 + $0x60] sm:$0xff]
        %v210 = vld [vmem:[%s186 + $0x68] sm:$0xff]
        %v211 = vld [vmem:[%s186 + $0x70] sm:$0xff]
        %v212 = vld [vmem:[%s186 + $0x78] sm:$0xff]
        %v213 = vld [vmem:[%s186 + $0x80] sm:$0xff]
        %v214 = vld [vmem:[%s186 + $0x88] sm:$0xff]
        %v215 = vld [vmem:[%s186 + $0x90] sm:$0xff]
        %v216 = vld [vmem:[%s186 + $0x98] sm:$0xff]
        %v217 = vld [vmem:[%s186 + $0xa0] sm:$0xff]
        %v218 = vld [vmem:[%s186 + $0xa8] sm:$0xff]
        %v219 = vld [vmem:[%s186 + $0xb0] sm:$0xff]
        %v220 = vld [vmem:[%s186 + $0xb8] sm:$0xff]
        %v221 = vld [vmem:[%s186 + $0xc0] sm:$0xff]
        %v222 = vld [vmem:[%s186 + $0xc8] sm:$0xff]
        %v223 = vld [vmem:[%s186 + $0xd0] sm:$0xff]
        %v224 = vld [vmem:[%s186 + $0xd8] sm:$0xff]
        %v225 = vld [vmem:[%s186 + $0xe0] sm:$0xff]
        %v226 = vld [vmem:[%s186 + $0xe8] sm:$0xff]
        %v227 = vld [vmem:[%s186 + $0xf0] sm:$0xff]
        %v228 = vld [vmem:[%s186 + $0xf8] sm:$0xff]
        %v229 = vld [vmem:[%s1] sm:$0x1]
        %s230 = sld [smem:[#allocation2]]
        %v231 = vstv %s230
        %vm232 = vcmask 261120
        %v234 = vsel %vm232, %v229, 0
        %v237 = vsel %vm232, %v197, 0
        %v240 = vsel %vm232, %v198, 0
        %v243 = vsel %vm232, %v199, 0
        %v246 = vsel %vm232, %v200, 0
        %v249 = vsel %vm232, %v201, 0
        %v252 = vsel %vm232, %v202, 0
        %v255 = vsel %vm232, %v203, 0
        %v258 = vsel %vm232, %v204, 0
        %v261 = vsel %vm232, %v205, 0
        %v264 = vsel %vm232, %v206, 0
        %v267 = vsel %vm232, %v207, 0
        %v270 = vsel %vm232, %v208, 0
        %v273 = vsel %vm232, %v209, 0
        %v276 = vsel %vm232, %v210, 0
        %v279 = vsel %vm232, %v211, 0
        %v282 = vsel %vm232, %v212, 0
        %v285 = vsel %vm232, %v213, 0
        %v288 = vsel %vm232, %v214, 0
        %v291 = vsel %vm232, %v215, 0
        %v294 = vsel %vm232, %v216, 0
        %v297 = vsel %vm232, %v217, 0
        %v300 = vsel %vm232, %v218, 0
        %v303 = vsel %vm232, %v219, 0
        %v306 = vsel %vm232, %v220, 0
        %v309 = vsel %vm232, %v221, 0
        %v312 = vsel %vm232, %v222, 0
        %v315 = vsel %vm232, %v223, 0
        %v318 = vsel %vm232, %v224, 0
        %v321 = vsel %vm232, %v225, 0
        %v324 = vsel %vm232, %v226, 0
        %v327 = vsel %vm232, %v227, 0
        %v330 = vsel %vm232, %v228, 0
        %332 = vmatprep.subr.mxu0 0.0
        %v333 = vand.u32 %v237, 4294901760
        %334 = vmatpush1.xpose.msra.mxu0 %v333
        %335 = vmatprep.subr.mxu0 0.0
        %v336 = vand.u32 %v240, 4294901760
        %337 = vmatpush1.xpose.msra.mxu0 %v336
        %338 = vmatprep.subr.mxu0 0.0
        %v339 = vand.u32 %v243, 4294901760
        %340 = vmatpush1.xpose.msra.mxu0 %v339
        %341 = vmatprep.subr.mxu0 0.0
        %v342 = vand.u32 %v246, 4294901760
        %343 = vmatpush1.xpose.msra.mxu0 %v342
        %344 = vmatprep.subr.mxu0 0.0
        %v345 = vand.u32 %v249, 4294901760
        %346 = vmatpush1.xpose.msra.mxu0 %v345
        %347 = vmatprep.subr.mxu0 0.0
        %v348 = vand.u32 %v252, 4294901760
        %349 = vmatpush1.xpose.msra.mxu0 %v348
        %350 = vmatprep.subr.mxu0 0.0
        %v351 = vand.u32 %v255, 4294901760
        %352 = vmatpush1.xpose.msra.mxu0 %v351
        %353 = vmatprep.subr.mxu0 0.0
        %v354 = vand.u32 %v258, 4294901760
        %355 = vmatpush1.xpose.msra.mxu0 %v354
        %356 = vmatprep.subr.mxu0 0.0
        %v357 = vand.u32 %v261, 4294901760
        %358 = vmatpush1.xpose.msra.mxu0 %v357
        %359 = vmatprep.subr.mxu0 0.0
        %v360 = vand.u32 %v264, 4294901760
        %361 = vmatpush1.xpose.msra.mxu0 %v360
        %362 = vmatprep.subr.mxu0 0.0
        %v363 = vand.u32 %v267, 4294901760
        %364 = vmatpush1.xpose.msra.mxu0 %v363
        %365 = vmatprep.subr.mxu0 0.0
        %v366 = vand.u32 %v270, 4294901760
        %367 = vmatpush1.xpose.msra.mxu0 %v366
        %368 = vmatprep.subr.mxu0 0.0
        %v369 = vand.u32 %v273, 4294901760
        %370 = vmatpush1.xpose.msra.mxu0 %v369
        %371 = vmatprep.subr.mxu0 0.0
        %v372 = vand.u32 %v276, 4294901760
        %373 = vmatpush1.xpose.msra.mxu0 %v372
        %374 = vmatprep.subr.mxu0 0.0
        %v375 = vand.u32 %v279, 4294901760
        %376 = vmatpush1.xpose.msra.mxu0 %v375
        %377 = vmatprep.subr.mxu0 0.0
        %v378 = vand.u32 %v282, 4294901760
        %379 = vmatpush1.xpose.msra.mxu0 %v378
        %380 = vmatprep.subr.mxu0 0.0
        %v381 = vand.u32 %v285, 4294901760
        %382 = vmatpush1.xpose.msra.mxu0 %v381
        %383 = vmatprep.subr.mxu0 0.0
        %v384 = vand.u32 %v288, 4294901760
        %385 = vmatpush1.xpose.msra.mxu0 %v384
        %386 = vmatprep.subr.mxu0 0.0
        %v387 = vand.u32 %v291, 4294901760
        %388 = vmatpush1.xpose.msra.mxu0 %v387
        %389 = vmatprep.subr.mxu0 0.0
        %v390 = vand.u32 %v294, 4294901760
        %391 = vmatpush1.xpose.msra.mxu0 %v390
        %392 = vmatprep.subr.mxu0 0.0
        %v393 = vand.u32 %v297, 4294901760
        %394 = vmatpush1.xpose.msra.mxu0 %v393
        %395 = vmatprep.subr.mxu0 0.0
        %v396 = vand.u32 %v300, 4294901760
        %397 = vmatpush1.xpose.msra.mxu0 %v396
        %398 = vmatprep.subr.mxu0 0.0
        %v399 = vand.u32 %v303, 4294901760
        %400 = vmatpush1.xpose.msra.mxu0 %v399
        %401 = vmatprep.subr.mxu0 0.0
        %v402 = vand.u32 %v306, 4294901760
        %403 = vmatpush1.xpose.msra.mxu0 %v402
        %404 = vmatprep.subr.mxu0 0.0
        %v405 = vand.u32 %v309, 4294901760
        %406 = vmatpush1.xpose.msra.mxu0 %v405
        %407 = vmatprep.subr.mxu0 0.0
        %v408 = vand.u32 %v312, 4294901760
        %409 = vmatpush1.xpose.msra.mxu0 %v408
        %410 = vmatprep.subr.mxu0 0.0
        %v411 = vand.u32 %v315, 4294901760
        %412 = vmatpush1.xpose.msra.mxu0 %v411
        %413 = vmatprep.subr.mxu0 0.0
        %v414 = vand.u32 %v318, 4294901760
        %415 = vmatpush1.xpose.msra.mxu0 %v414
        %416 = vmatprep.subr.mxu0 0.0
        %v417 = vand.u32 %v321, 4294901760
        %418 = vmatpush1.xpose.msra.mxu0 %v417
        %419 = vmatprep.subr.mxu0 0.0
        %v420 = vand.u32 %v324, 4294901760
        %421 = vmatpush1.xpose.msra.mxu0 %v420
        %422 = vmatprep.subr.mxu0 0.0
        %v423 = vand.u32 %v327, 4294901760
        %424 = vmatpush1.xpose.msra.mxu0 %v423
        %425 = vmatprep.subr.mxu0 0.0
        %v426 = vand.u32 %v330, 4294901760
        %427 = vmatpush1.xpose.msra.mxu0 %v426
        %428 = vmatprep.mubr.f32.mxu0 0.0
        %v429 = vand.u32 %v234, 4294901760
        %v430 = vsub.f32 %v234, %v429
        %v431 = vand.u32 %v430, 4294901760
        %v432 = vsub.f32 %v430, %v431
        %v433 = vand.u32 %v432, 4294901760
        %434 = vmatmul.mubr.f32.gmra.mrb[0].mxu0 %v433
        %v435 = vpop.f32.mrb[0].mxu0
        %v436 = vadd.f32 %v231, %v435
        %v437 = vpop.f32.mrb[0].mxu0
        %v438 = vadd.f32 %v231, %v437
        %439 = vdwg.mxu0
        %440 = vmatprep.subr.mxu0 0.0
        %v441 = vand.u32 %v237, 4294901760
        %v442 = vsub.f32 %v237, %v441
        %v443 = vand.u32 %v442, 4294901760
        %v444 = vsub.f32 %v442, %v443
        %v445 = vand.u32 %v444, 4294901760
        %446 = vmatpush1.xpose.msra.mxu0 %v445
        %447 = vmatprep.subr.mxu0 0.0
        %v448 = vand.u32 %v240, 4294901760
        %v449 = vsub.f32 %v240, %v448
        %v450 = vand.u32 %v449, 4294901760
        %v451 = vsub.f32 %v449, %v450
        %v452 = vand.u32 %v451, 4294901760
        %453 = vmatpush1.xpose.msra.mxu0 %v452
        %454 = vmatprep.subr.mxu0 0.0
        %v455 = vand.u32 %v243, 4294901760
        %v456 = vsub.f32 %v243, %v455
        %v457 = vand.u32 %v456, 4294901760
        %v458 = vsub.f32 %v456, %v457
        %v459 = vand.u32 %v458, 4294901760
        %460 = vmatpush1.xpose.msra.mxu0 %v459
        %461 = vmatprep.subr.mxu0 0.0
        %v462 = vand.u32 %v246, 4294901760
        %v463 = vsub.f32 %v246, %v462
        %v464 = vand.u32 %v463, 4294901760
        %v465 = vsub.f32 %v463, %v464
        %v466 = vand.u32 %v465, 4294901760
        %467 = vmatpush1.xpose.msra.mxu0 %v466
        %468 = vmatprep.subr.mxu0 0.0
        %v469 = vand.u32 %v249, 4294901760
        %v470 = vsub.f32 %v249, %v469
        %v471 = vand.u32 %v470, 4294901760
        %v472 = vsub.f32 %v470, %v471
        %v473 = vand.u32 %v472, 4294901760
        %474 = vmatpush1.xpose.msra.mxu0 %v473
        %475 = vmatprep.subr.mxu0 0.0
        %v476 = vand.u32 %v252, 4294901760
        %v477 = vsub.f32 %v252, %v476
        %v478 = vand.u32 %v477, 4294901760
        %v479 = vsub.f32 %v477, %v478
        %v480 = vand.u32 %v479, 4294901760
        %481 = vmatpush1.xpose.msra.mxu0 %v480
        %482 = vmatprep.subr.mxu0 0.0
        %v483 = vand.u32 %v255, 4294901760
        %v484 = vsub.f32 %v255, %v483
        %v485 = vand.u32 %v484, 4294901760
        %v486 = vsub.f32 %v484, %v485
        %v487 = vand.u32 %v486, 4294901760
        %488 = vmatpush1.xpose.msra.mxu0 %v487
        %489 = vmatprep.subr.mxu0 0.0
        %v490 = vand.u32 %v258, 4294901760
        %v491 = vsub.f32 %v258, %v490
        %v492 = vand.u32 %v491, 4294901760
        %v493 = vsub.f32 %v491, %v492
        %v494 = vand.u32 %v493, 4294901760
        %495 = vmatpush1.xpose.msra.mxu0 %v494
        %496 = vmatprep.subr.mxu0 0.0
        %v497 = vand.u32 %v261, 4294901760
        %v498 = vsub.f32 %v261, %v497
        %v499 = vand.u32 %v498, 4294901760
        %v500 = vsub.f32 %v498, %v499
        %v501 = vand.u32 %v500, 4294901760
        %502 = vmatpush1.xpose.msra.mxu0 %v501
        %503 = vmatprep.subr.mxu0 0.0
        %v504 = vand.u32 %v264, 4294901760
        %v505 = vsub.f32 %v264, %v504
        %v506 = vand.u32 %v505, 4294901760
        %v507 = vsub.f32 %v505, %v506
        %v508 = vand.u32 %v507, 4294901760
        %509 = vmatpush1.xpose.msra.mxu0 %v508
        %510 = vmatprep.subr.mxu0 0.0
        %v511 = vand.u32 %v267, 4294901760
        %v512 = vsub.f32 %v267, %v511
        %v513 = vand.u32 %v512, 4294901760
        %v514 = vsub.f32 %v512, %v513
        %v515 = vand.u32 %v514, 4294901760
        %516 = vmatpush1.xpose.msra.mxu0 %v515
        %517 = vmatprep.subr.mxu0 0.0
        %v518 = vand.u32 %v270, 4294901760
        %v519 = vsub.f32 %v270, %v518
        %v520 = vand.u32 %v519, 4294901760
        %v521 = vsub.f32 %v519, %v520
        %v522 = vand.u32 %v521, 4294901760
        %523 = vmatpush1.xpose.msra.mxu0 %v522
        %524 = vmatprep.subr.mxu0 0.0
        %v525 = vand.u32 %v273, 4294901760
        %v526 = vsub.f32 %v273, %v525
        %v527 = vand.u32 %v526, 4294901760
        %v528 = vsub.f32 %v526, %v527
        %v529 = vand.u32 %v528, 4294901760
        %530 = vmatpush1.xpose.msra.mxu0 %v529
        %531 = vmatprep.subr.mxu0 0.0
        %v532 = vand.u32 %v276, 4294901760
        %v533 = vsub.f32 %v276, %v532
        %v534 = vand.u32 %v533, 4294901760
        %v535 = vsub.f32 %v533, %v534
        %v536 = vand.u32 %v535, 4294901760
        %537 = vmatpush1.xpose.msra.mxu0 %v536
        %538 = vmatprep.subr.mxu0 0.0
        %v539 = vand.u32 %v279, 4294901760
        %v540 = vsub.f32 %v279, %v539
        %v541 = vand.u32 %v540, 4294901760
        %v542 = vsub.f32 %v540, %v541
        %v543 = vand.u32 %v542, 4294901760
        %544 = vmatpush1.xpose.msra.mxu0 %v543
        %545 = vmatprep.subr.mxu0 0.0
        %v546 = vand.u32 %v282, 4294901760
        %v547 = vsub.f32 %v282, %v546
        %v548 = vand.u32 %v547, 4294901760
        %v549 = vsub.f32 %v547, %v548
        %v550 = vand.u32 %v549, 4294901760
        %551 = vmatpush1.xpose.msra.mxu0 %v550
        %552 = vmatprep.subr.mxu0 0.0
        %v553 = vand.u32 %v285, 4294901760
        %v554 = vsub.f32 %v285, %v553
        %v555 = vand.u32 %v554, 4294901760
        %v556 = vsub.f32 %v554, %v555
        %v557 = vand.u32 %v556, 4294901760
        %558 = vmatpush1.xpose.msra.mxu0 %v557
        %559 = vmatprep.subr.mxu0 0.0
        %v560 = vand.u32 %v288, 4294901760
        %v561 = vsub.f32 %v288, %v560
        %v562 = vand.u32 %v561, 4294901760
        %v563 = vsub.f32 %v561, %v562
        %v564 = vand.u32 %v563, 4294901760
        %565 = vmatpush1.xpose.msra.mxu0 %v564
        %566 = vmatprep.subr.mxu0 0.0
        %v567 = vand.u32 %v291, 4294901760
        %v568 = vsub.f32 %v291, %v567
        %v569 = vand.u32 %v568, 4294901760
        %v570 = vsub.f32 %v568, %v569
        %v571 = vand.u32 %v570, 4294901760
        %572 = vmatpush1.xpose.msra.mxu0 %v571
        %573 = vmatprep.subr.mxu0 0.0
        %v574 = vand.u32 %v294, 4294901760
        %v575 = vsub.f32 %v294, %v574
        %v576 = vand.u32 %v575, 4294901760
        %v577 = vsub.f32 %v575, %v576
        %v578 = vand.u32 %v577, 4294901760
        %579 = vmatpush1.xpose.msra.mxu0 %v578
        %580 = vmatprep.subr.mxu0 0.0
        %v581 = vand.u32 %v297, 4294901760
        %v582 = vsub.f32 %v297, %v581
        %v583 = vand.u32 %v582, 4294901760
        %v584 = vsub.f32 %v582, %v583
        %v585 = vand.u32 %v584, 4294901760
        %586 = vmatpush1.xpose.msra.mxu0 %v585
        %587 = vmatprep.subr.mxu0 0.0
        %v588 = vand.u32 %v300, 4294901760
        %v589 = vsub.f32 %v300, %v588
        %v590 = vand.u32 %v589, 4294901760
        %v591 = vsub.f32 %v589, %v590
        %v592 = vand.u32 %v591, 4294901760
        %593 = vmatpush1.xpose.msra.mxu0 %v592
        %594 = vmatprep.subr.mxu0 0.0
        %v595 = vand.u32 %v303, 4294901760
        %v596 = vsub.f32 %v303, %v595
        %v597 = vand.u32 %v596, 4294901760
        %v598 = vsub.f32 %v596, %v597
        %v599 = vand.u32 %v598, 4294901760
        %600 = vmatpush1.xpose.msra.mxu0 %v599
        %601 = vmatprep.subr.mxu0 0.0
        %v602 = vand.u32 %v306, 4294901760
        %v603 = vsub.f32 %v306, %v602
        %v604 = vand.u32 %v603, 4294901760
        %v605 = vsub.f32 %v603, %v604
        %v606 = vand.u32 %v605, 4294901760
        %607 = vmatpush1.xpose.msra.mxu0 %v606
        %608 = vmatprep.subr.mxu0 0.0
        %v609 = vand.u32 %v309, 4294901760
        %v610 = vsub.f32 %v309, %v609
        %v611 = vand.u32 %v610, 4294901760
        %v612 = vsub.f32 %v610, %v611
        %v613 = vand.u32 %v612, 4294901760
        %614 = vmatpush1.xpose.msra.mxu0 %v613
        %615 = vmatprep.subr.mxu0 0.0
        %v616 = vand.u32 %v312, 4294901760
        %v617 = vsub.f32 %v312, %v616
        %v618 = vand.u32 %v617, 4294901760
        %v619 = vsub.f32 %v617, %v618
        %v620 = vand.u32 %v619, 4294901760
        %621 = vmatpush1.xpose.msra.mxu0 %v620
        %622 = vmatprep.subr.mxu0 0.0
        %v623 = vand.u32 %v315, 4294901760
        %v624 = vsub.f32 %v315, %v623
        %v625 = vand.u32 %v624, 4294901760
        %v626 = vsub.f32 %v624, %v625
        %v627 = vand.u32 %v626, 4294901760
        %628 = vmatpush1.xpose.msra.mxu0 %v627
        %629 = vmatprep.subr.mxu0 0.0
        %v630 = vand.u32 %v318, 4294901760
        %v631 = vsub.f32 %v318, %v630
        %v632 = vand.u32 %v631, 4294901760
        %v633 = vsub.f32 %v631, %v632
        %v634 = vand.u32 %v633, 4294901760
        %635 = vmatpush1.xpose.msra.mxu0 %v634
        %636 = vmatprep.subr.mxu0 0.0
        %v637 = vand.u32 %v321, 4294901760
        %v638 = vsub.f32 %v321, %v637
        %v639 = vand.u32 %v638, 4294901760
        %v640 = vsub.f32 %v638, %v639
        %v641 = vand.u32 %v640, 4294901760
        %642 = vmatpush1.xpose.msra.mxu0 %v641
        %643 = vmatprep.subr.mxu0 0.0
        %v644 = vand.u32 %v324, 4294901760
        %v645 = vsub.f32 %v324, %v644
        %v646 = vand.u32 %v645, 4294901760
        %v647 = vsub.f32 %v645, %v646
        %v648 = vand.u32 %v647, 4294901760
        %649 = vmatpush1.xpose.msra.mxu0 %v648
        %650 = vmatprep.subr.mxu0 0.0
        %v651 = vand.u32 %v327, 4294901760
        %v652 = vsub.f32 %v327, %v651
        %v653 = vand.u32 %v652, 4294901760
        %v654 = vsub.f32 %v652, %v653
        %v655 = vand.u32 %v654, 4294901760
        %656 = vmatpush1.xpose.msra.mxu0 %v655
        %657 = vmatprep.subr.mxu0 0.0
        %v658 = vand.u32 %v330, 4294901760
        %v659 = vsub.f32 %v330, %v658
        %v660 = vand.u32 %v659, 4294901760
        %v661 = vsub.f32 %v659, %v660
        %v662 = vand.u32 %v661, 4294901760
        %663 = vmatpush1.xpose.msra.mxu0 %v662
        %664 = vmatprep.mubr.f32.mxu0 0.0
        %v665 = vand.u32 %v234, 4294901760
        %666 = vmatmul.mubr.f32.gmra.mrb[0].mxu0 %v665
        %v667 = vpop.f32.mrb[0].mxu0
        %v668 = vadd.f32 %v436, %v667
        %v669 = vpop.f32.mrb[0].mxu0
        %v670 = vadd.f32 %v438, %v669
        %671 = vdwg.mxu0
        %672 = vmatprep.subr.mxu0 0.0
        %v673 = vand.u32 %v237, 4294901760
        %v674 = vsub.f32 %v237, %v673
        %675 = vmatpush1.xpose.msra.mxu0 %v674
        %676 = vmatprep.subr.mxu0 0.0
        %v677 = vand.u32 %v240, 4294901760
        %v678 = vsub.f32 %v240, %v677
        %679 = vmatpush1.xpose.msra.mxu0 %v678
        %680 = vmatprep.subr.mxu0 0.0
        %v681 = vand.u32 %v243, 4294901760
        %v682 = vsub.f32 %v243, %v681
        %683 = vmatpush1.xpose.msra.mxu0 %v682
        %684 = vmatprep.subr.mxu0 0.0
        %v685 = vand.u32 %v246, 4294901760
        %v686 = vsub.f32 %v246, %v685
        %687 = vmatpush1.xpose.msra.mxu0 %v686
        %688 = vmatprep.subr.mxu0 0.0
        %v689 = vand.u32 %v249, 4294901760
        %v690 = vsub.f32 %v249, %v689
        %691 = vmatpush1.xpose.msra.mxu0 %v690
        %692 = vmatprep.subr.mxu0 0.0
        %v693 = vand.u32 %v252, 4294901760
        %v694 = vsub.f32 %v252, %v693
        %695 = vmatpush1.xpose.msra.mxu0 %v694
        %696 = vmatprep.subr.mxu0 0.0
        %v697 = vand.u32 %v255, 4294901760
        %v698 = vsub.f32 %v255, %v697
        %699 = vmatpush1.xpose.msra.mxu0 %v698
        %700 = vmatprep.subr.mxu0 0.0
        %v701 = vand.u32 %v258, 4294901760
        %v702 = vsub.f32 %v258, %v701
        %703 = vmatpush1.xpose.msra.mxu0 %v702
        %704 = vmatprep.subr.mxu0 0.0
        %v705 = vand.u32 %v261, 4294901760
        %v706 = vsub.f32 %v261, %v705
        %707 = vmatpush1.xpose.msra.mxu0 %v706
        %708 = vmatprep.subr.mxu0 0.0
        %v709 = vand.u32 %v264, 4294901760
        %v710 = vsub.f32 %v264, %v709
        %711 = vmatpush1.xpose.msra.mxu0 %v710
        %712 = vmatprep.subr.mxu0 0.0
        %v713 = vand.u32 %v267, 4294901760
        %v714 = vsub.f32 %v267, %v713
        %715 = vmatpush1.xpose.msra.mxu0 %v714
        %716 = vmatprep.subr.mxu0 0.0
        %v717 = vand.u32 %v270, 4294901760
        %v718 = vsub.f32 %v270, %v717
        %719 = vmatpush1.xpose.msra.mxu0 %v718
        %720 = vmatprep.subr.mxu0 0.0
        %v721 = vand.u32 %v273, 4294901760
        %v722 = vsub.f32 %v273, %v721
        %723 = vmatpush1.xpose.msra.mxu0 %v722
        %724 = vmatprep.subr.mxu0 0.0
        %v725 = vand.u32 %v276, 4294901760
        %v726 = vsub.f32 %v276, %v725
        %727 = vmatpush1.xpose.msra.mxu0 %v726
        %728 = vmatprep.subr.mxu0 0.0
        %v729 = vand.u32 %v279, 4294901760
        %v730 = vsub.f32 %v279, %v729
        %731 = vmatpush1.xpose.msra.mxu0 %v730
        %732 = vmatprep.subr.mxu0 0.0
        %v733 = vand.u32 %v282, 4294901760
        %v734 = vsub.f32 %v282, %v733
        %735 = vmatpush1.xpose.msra.mxu0 %v734
        %736 = vmatprep.subr.mxu0 0.0
        %v737 = vand.u32 %v285, 4294901760
        %v738 = vsub.f32 %v285, %v737
        %739 = vmatpush1.xpose.msra.mxu0 %v738
        %740 = vmatprep.subr.mxu0 0.0
        %v741 = vand.u32 %v288, 4294901760
        %v742 = vsub.f32 %v288, %v741
        %743 = vmatpush1.xpose.msra.mxu0 %v742
        %744 = vmatprep.subr.mxu0 0.0
        %v745 = vand.u32 %v291, 4294901760
        %v746 = vsub.f32 %v291, %v745
        %747 = vmatpush1.xpose.msra.mxu0 %v746
        %748 = vmatprep.subr.mxu0 0.0
        %v749 = vand.u32 %v294, 4294901760
        %v750 = vsub.f32 %v294, %v749
        %751 = vmatpush1.xpose.msra.mxu0 %v750
        %752 = vmatprep.subr.mxu0 0.0
        %v753 = vand.u32 %v297, 4294901760
        %v754 = vsub.f32 %v297, %v753
        %755 = vmatpush1.xpose.msra.mxu0 %v754
        %756 = vmatprep.subr.mxu0 0.0
        %v757 = vand.u32 %v300, 4294901760
        %v758 = vsub.f32 %v300, %v757
        %759 = vmatpush1.xpose.msra.mxu0 %v758
        %760 = vmatprep.subr.mxu0 0.0
        %v761 = vand.u32 %v303, 4294901760
        %v762 = vsub.f32 %v303, %v761
        %763 = vmatpush1.xpose.msra.mxu0 %v762
        %764 = vmatprep.subr.mxu0 0.0
        %v765 = vand.u32 %v306, 4294901760
        %v766 = vsub.f32 %v306, %v765
        %767 = vmatpush1.xpose.msra.mxu0 %v766
        %768 = vmatprep.subr.mxu0 0.0
        %v769 = vand.u32 %v309, 4294901760
        %v770 = vsub.f32 %v309, %v769
        %771 = vmatpush1.xpose.msra.mxu0 %v770
        %772 = vmatprep.subr.mxu0 0.0
        %v773 = vand.u32 %v312, 4294901760
        %v774 = vsub.f32 %v312, %v773
        %775 = vmatpush1.xpose.msra.mxu0 %v774
        %776 = vmatprep.subr.mxu0 0.0
        %v777 = vand.u32 %v315, 4294901760
        %v778 = vsub.f32 %v315, %v777
        %779 = vmatpush1.xpose.msra.mxu0 %v778
        %780 = vmatprep.subr.mxu0 0.0
        %v781 = vand.u32 %v318, 4294901760
        %v782 = vsub.f32 %v318, %v781
        %783 = vmatpush1.xpose.msra.mxu0 %v782
        %784 = vmatprep.subr.mxu0 0.0
        %v785 = vand.u32 %v321, 4294901760
        %v786 = vsub.f32 %v321, %v785
        %787 = vmatpush1.xpose.msra.mxu0 %v786
        %788 = vmatprep.subr.mxu0 0.0
        %v789 = vand.u32 %v324, 4294901760
        %v790 = vsub.f32 %v324, %v789
        %791 = vmatpush1.xpose.msra.mxu0 %v790
        %792 = vmatprep.subr.mxu0 0.0
        %v793 = vand.u32 %v327, 4294901760
        %v794 = vsub.f32 %v327, %v793
        %795 = vmatpush1.xpose.msra.mxu0 %v794
        %796 = vmatprep.subr.mxu0 0.0
        %v797 = vand.u32 %v330, 4294901760
        %v798 = vsub.f32 %v330, %v797
        %799 = vmatpush1.xpose.msra.mxu0 %v798
        %800 = vmatprep.mubr.f32.mxu0 0.0
        %v801 = vand.u32 %v234, 4294901760
        %v802 = vsub.f32 %v234, %v801
        %803 = vmatmul.mubr.f32.gmra.mrb[0].mxu0 %v802
        %v804 = vpop.f32.mrb[0].mxu0
        %v805 = vadd.f32 %v668, %v804
        %v806 = vpop.f32.mrb[0].mxu0
        %v807 = vadd.f32 %v670, %v806
        %808 = vdwg.mxu0
        %809 = vmatprep.subr.mxu0 0.0
        %v810 = vand.u32 %v237, 4294901760
        %811 = vmatpush1.xpose.msra.mxu0 %v810
        %812 = vmatprep.subr.mxu0 0.0
        %v813 = vand.u32 %v240, 4294901760
        %814 = vmatpush1.xpose.msra.mxu0 %v813
        %815 = vmatprep.subr.mxu0 0.0
        %v816 = vand.u32 %v243, 4294901760
        %817 = vmatpush1.xpose.msra.mxu0 %v816
        %818 = vmatprep.subr.mxu0 0.0
        %v819 = vand.u32 %v246, 4294901760
        %820 = vmatpush1.xpose.msra.mxu0 %v819
        %821 = vmatprep.subr.mxu0 0.0
        %v822 = vand.u32 %v249, 4294901760
        %823 = vmatpush1.xpose.msra.mxu0 %v822
        %824 = vmatprep.subr.mxu0 0.0
        %v825 = vand.u32 %v252, 4294901760
        %826 = vmatpush1.xpose.msra.mxu0 %v825
        %827 = vmatprep.subr.mxu0 0.0
        %v828 = vand.u32 %v255, 4294901760
        %829 = vmatpush1.xpose.msra.mxu0 %v828
        %830 = vmatprep.subr.mxu0 0.0
        %v831 = vand.u32 %v258, 4294901760
        %832 = vmatpush1.xpose.msra.mxu0 %v831
        %833 = vmatprep.subr.mxu0 0.0
        %v834 = vand.u32 %v261, 4294901760
        %835 = vmatpush1.xpose.msra.mxu0 %v834
        %836 = vmatprep.subr.mxu0 0.0
        %v837 = vand.u32 %v264, 4294901760
        %838 = vmatpush1.xpose.msra.mxu0 %v837
        %839 = vmatprep.subr.mxu0 0.0
        %v840 = vand.u32 %v267, 4294901760
        %841 = vmatpush1.xpose.msra.mxu0 %v840
        %842 = vmatprep.subr.mxu0 0.0
        %v843 = vand.u32 %v270, 4294901760
        %844 = vmatpush1.xpose.msra.mxu0 %v843
        %845 = vmatprep.subr.mxu0 0.0
        %v846 = vand.u32 %v273, 4294901760
        %847 = vmatpush1.xpose.msra.mxu0 %v846
        %848 = vmatprep.subr.mxu0 0.0
        %v849 = vand.u32 %v276, 4294901760
        %850 = vmatpush1.xpose.msra.mxu0 %v849
        %851 = vmatprep.subr.mxu0 0.0
        %v852 = vand.u32 %v279, 4294901760
        %853 = vmatpush1.xpose.msra.mxu0 %v852
        %854 = vmatprep.subr.mxu0 0.0
        %v855 = vand.u32 %v282, 4294901760
        %856 = vmatpush1.xpose.msra.mxu0 %v855
        %857 = vmatprep.subr.mxu0 0.0
        %v858 = vand.u32 %v285, 4294901760
        %859 = vmatpush1.xpose.msra.mxu0 %v858
        %860 = vmatprep.subr.mxu0 0.0
        %v861 = vand.u32 %v288, 4294901760
        %862 = vmatpush1.xpose.msra.mxu0 %v861
        %863 = vmatprep.subr.mxu0 0.0
        %v864 = vand.u32 %v291, 4294901760
        %865 = vmatpush1.xpose.msra.mxu0 %v864
        %866 = vmatprep.subr.mxu0 0.0
        %v867 = vand.u32 %v294, 4294901760
        %868 = vmatpush1.xpose.msra.mxu0 %v867
        %869 = vmatprep.subr.mxu0 0.0
        %v870 = vand.u32 %v297, 4294901760
        %871 = vmatpush1.xpose.msra.mxu0 %v870
        %872 = vmatprep.subr.mxu0 0.0
        %v873 = vand.u32 %v300, 4294901760
        %874 = vmatpush1.xpose.msra.mxu0 %v873
        %875 = vmatprep.subr.mxu0 0.0
        %v876 = vand.u32 %v303, 4294901760
        %877 = vmatpush1.xpose.msra.mxu0 %v876
        %878 = vmatprep.subr.mxu0 0.0
        %v879 = vand.u32 %v306, 4294901760
        %880 = vmatpush1.xpose.msra.mxu0 %v879
        %881 = vmatprep.subr.mxu0 0.0
        %v882 = vand.u32 %v309, 4294901760
        %883 = vmatpush1.xpose.msra.mxu0 %v882
        %884 = vmatprep.subr.mxu0 0.0
        %v885 = vand.u32 %v312, 4294901760
        %886 = vmatpush1.xpose.msra.mxu0 %v885
        %887 = vmatprep.subr.mxu0 0.0
        %v888 = vand.u32 %v315, 4294901760
        %889 = vmatpush1.xpose.msra.mxu0 %v888
        %890 = vmatprep.subr.mxu0 0.0
        %v891 = vand.u32 %v318, 4294901760
        %892 = vmatpush1.xpose.msra.mxu0 %v891
        %893 = vmatprep.subr.mxu0 0.0
        %v894 = vand.u32 %v321, 4294901760
        %895 = vmatpush1.xpose.msra.mxu0 %v894
        %896 = vmatprep.subr.mxu0 0.0
        %v897 = vand.u32 %v324, 4294901760
        %898 = vmatpush1.xpose.msra.mxu0 %v897
        %899 = vmatprep.subr.mxu0 0.0
        %v900 = vand.u32 %v327, 4294901760
        %901 = vmatpush1.xpose.msra.mxu0 %v900
        %902 = vmatprep.subr.mxu0 0.0
        %v903 = vand.u32 %v330, 4294901760
        %904 = vmatpush1.xpose.msra.mxu0 %v903
        %905 = vmatprep.mubr.f32.mxu0 0.0
        %v906 = vand.u32 %v234, 4294901760
        %v907 = vsub.f32 %v234, %v906
        %v908 = vand.u32 %v907, 4294901760
        %909 = vmatmul.mubr.f32.gmra.mrb[0].mxu0 %v908
        %v910 = vpop.f32.mrb[0].mxu0
        %v911 = vadd.f32 %v805, %v910
        %v912 = vpop.f32.mrb[0].mxu0
        %v913 = vadd.f32 %v807, %v912
        %914 = vdwg.mxu0
        %915 = vmatprep.subr.mxu0 0.0
        %v916 = vand.u32 %v237, 4294901760
        %v917 = vsub.f32 %v237, %v916
        %v918 = vand.u32 %v917, 4294901760
        %919 = vmatpush1.xpose.msra.mxu0 %v918
        %920 = vmatprep.subr.mxu0 0.0
        %v921 = vand.u32 %v240, 4294901760
        %v922 = vsub.f32 %v240, %v921
        %v923 = vand.u32 %v922, 4294901760
        %924 = vmatpush1.xpose.msra.mxu0 %v923
        %925 = vmatprep.subr.mxu0 0.0
        %v926 = vand.u32 %v243, 4294901760
        %v927 = vsub.f32 %v243, %v926
        %v928 = vand.u32 %v927, 4294901760
        %929 = vmatpush1.xpose.msra.mxu0 %v928
        %930 = vmatprep.subr.mxu0 0.0
        %v931 = vand.u32 %v246, 4294901760
        %v932 = vsub.f32 %v246, %v931
        %v933 = vand.u32 %v932, 4294901760
        %934 = vmatpush1.xpose.msra.mxu0 %v933
        %935 = vmatprep.subr.mxu0 0.0
        %v936 = vand.u32 %v249, 4294901760
        %v937 = vsub.f32 %v249, %v936
        %v938 = vand.u32 %v937, 4294901760
        %939 = vmatpush1.xpose.msra.mxu0 %v938
        %940 = vmatprep.subr.mxu0 0.0
        %v941 = vand.u32 %v252, 4294901760
        %v942 = vsub.f32 %v252, %v941
        %v943 = vand.u32 %v942, 4294901760
        %944 = vmatpush1.xpose.msra.mxu0 %v943
        %945 = vmatprep.subr.mxu0 0.0
        %v946 = vand.u32 %v255, 4294901760
        %v947 = vsub.f32 %v255, %v946
        %v948 = vand.u32 %v947, 4294901760
        %949 = vmatpush1.xpose.msra.mxu0 %v948
        %950 = vmatprep.subr.mxu0 0.0
        %v951 = vand.u32 %v258, 4294901760
        %v952 = vsub.f32 %v258, %v951
        %v953 = vand.u32 %v952, 4294901760
        %954 = vmatpush1.xpose.msra.mxu0 %v953
        %955 = vmatprep.subr.mxu0 0.0
        %v956 = vand.u32 %v261, 4294901760
        %v957 = vsub.f32 %v261, %v956
        %v958 = vand.u32 %v957, 4294901760
        %959 = vmatpush1.xpose.msra.mxu0 %v958
        %960 = vmatprep.subr.mxu0 0.0
        %v961 = vand.u32 %v264, 4294901760
        %v962 = vsub.f32 %v264, %v961
        %v963 = vand.u32 %v962, 4294901760
        %964 = vmatpush1.xpose.msra.mxu0 %v963
        %965 = vmatprep.subr.mxu0 0.0
        %v966 = vand.u32 %v267, 4294901760
        %v967 = vsub.f32 %v267, %v966
        %v968 = vand.u32 %v967, 4294901760
        %969 = vmatpush1.xpose.msra.mxu0 %v968
        %970 = vmatprep.subr.mxu0 0.0
        %v971 = vand.u32 %v270, 4294901760
        %v972 = vsub.f32 %v270, %v971
        %v973 = vand.u32 %v972, 4294901760
        %974 = vmatpush1.xpose.msra.mxu0 %v973
        %975 = vmatprep.subr.mxu0 0.0
        %v976 = vand.u32 %v273, 4294901760
        %v977 = vsub.f32 %v273, %v976
        %v978 = vand.u32 %v977, 4294901760
        %979 = vmatpush1.xpose.msra.mxu0 %v978
        %980 = vmatprep.subr.mxu0 0.0
        %v981 = vand.u32 %v276, 4294901760
        %v982 = vsub.f32 %v276, %v981
        %v983 = vand.u32 %v982, 4294901760
        %984 = vmatpush1.xpose.msra.mxu0 %v983
        %985 = vmatprep.subr.mxu0 0.0
        %v986 = vand.u32 %v279, 4294901760
        %v987 = vsub.f32 %v279, %v986
        %v988 = vand.u32 %v987, 4294901760
        %989 = vmatpush1.xpose.msra.mxu0 %v988
        %990 = vmatprep.subr.mxu0 0.0
        %v991 = vand.u32 %v282, 4294901760
        %v992 = vsub.f32 %v282, %v991
        %v993 = vand.u32 %v992, 4294901760
        %994 = vmatpush1.xpose.msra.mxu0 %v993
        %995 = vmatprep.subr.mxu0 0.0
        %v996 = vand.u32 %v285, 4294901760
        %v997 = vsub.f32 %v285, %v996
        %v998 = vand.u32 %v997, 4294901760
        %999 = vmatpush1.xpose.msra.mxu0 %v998
        %1000 = vmatprep.subr.mxu0 0.0
        %v1001 = vand.u32 %v288, 4294901760
        %v1002 = vsub.f32 %v288, %v1001
        %v1003 = vand.u32 %v1002, 4294901760
        %1004 = vmatpush1.xpose.msra.mxu0 %v1003
        %1005 = vmatprep.subr.mxu0 0.0
        %v1006 = vand.u32 %v291, 4294901760
        %v1007 = vsub.f32 %v291, %v1006
        %v1008 = vand.u32 %v1007, 4294901760
        %1009 = vmatpush1.xpose.msra.mxu0 %v1008
        %1010 = vmatprep.subr.mxu0 0.0
        %v1011 = vand.u32 %v294, 4294901760
        %v1012 = vsub.f32 %v294, %v1011
        %v1013 = vand.u32 %v1012, 4294901760
        %1014 = vmatpush1.xpose.msra.mxu0 %v1013
        %1015 = vmatprep.subr.mxu0 0.0
        %v1016 = vand.u32 %v297, 4294901760
        %v1017 = vsub.f32 %v297, %v1016
        %v1018 = vand.u32 %v1017, 4294901760
        %1019 = vmatpush1.xpose.msra.mxu0 %v1018
        %1020 = vmatprep.subr.mxu0 0.0
        %v1021 = vand.u32 %v300, 4294901760
        %v1022 = vsub.f32 %v300, %v1021
        %v1023 = vand.u32 %v1022, 4294901760
        %1024 = vmatpush1.xpose.msra.mxu0 %v1023
        %1025 = vmatprep.subr.mxu0 0.0
        %v1026 = vand.u32 %v303, 4294901760
        %v1027 = vsub.f32 %v303, %v1026
        %v1028 = vand.u32 %v1027, 4294901760
        %1029 = vmatpush1.xpose.msra.mxu0 %v1028
        %1030 = vmatprep.subr.mxu0 0.0
        %v1031 = vand.u32 %v306, 4294901760
        %v1032 = vsub.f32 %v306, %v1031
        %v1033 = vand.u32 %v1032, 4294901760
        %1034 = vmatpush1.xpose.msra.mxu0 %v1033
        %1035 = vmatprep.subr.mxu0 0.0
        %v1036 = vand.u32 %v309, 4294901760
        %v1037 = vsub.f32 %v309, %v1036
        %v1038 = vand.u32 %v1037, 4294901760
        %1039 = vmatpush1.xpose.msra.mxu0 %v1038
        %1040 = vmatprep.subr.mxu0 0.0
        %v1041 = vand.u32 %v312, 4294901760
        %v1042 = vsub.f32 %v312, %v1041
        %v1043 = vand.u32 %v1042, 4294901760
        %1044 = vmatpush1.xpose.msra.mxu0 %v1043
        %1045 = vmatprep.subr.mxu0 0.0
        %v1046 = vand.u32 %v315, 4294901760
        %v1047 = vsub.f32 %v315, %v1046
        %v1048 = vand.u32 %v1047, 4294901760
        %1049 = vmatpush1.xpose.msra.mxu0 %v1048
        %1050 = vmatprep.subr.mxu0 0.0
        %v1051 = vand.u32 %v318, 4294901760
        %v1052 = vsub.f32 %v318, %v1051
        %v1053 = vand.u32 %v1052, 4294901760
        %1054 = vmatpush1.xpose.msra.mxu0 %v1053
        %1055 = vmatprep.subr.mxu0 0.0
        %v1056 = vand.u32 %v321, 4294901760
        %v1057 = vsub.f32 %v321, %v1056
        %v1058 = vand.u32 %v1057, 4294901760
        %1059 = vmatpush1.xpose.msra.mxu0 %v1058
        %1060 = vmatprep.subr.mxu0 0.0
        %v1061 = vand.u32 %v324, 4294901760
        %v1062 = vsub.f32 %v324, %v1061
        %v1063 = vand.u32 %v1062, 4294901760
        %1064 = vmatpush1.xpose.msra.mxu0 %v1063
        %1065 = vmatprep.subr.mxu0 0.0
        %v1066 = vand.u32 %v327, 4294901760
        %v1067 = vsub.f32 %v327, %v1066
        %v1068 = vand.u32 %v1067, 4294901760
        %1069 = vmatpush1.xpose.msra.mxu0 %v1068
        %1070 = vmatprep.subr.mxu0 0.0
        %v1071 = vand.u32 %v330, 4294901760
        %v1072 = vsub.f32 %v330, %v1071
        %v1073 = vand.u32 %v1072, 4294901760
        %1074 = vmatpush1.xpose.msra.mxu0 %v1073
        %1075 = vmatprep.mubr.f32.mxu0 0.0
        %v1076 = vand.u32 %v234, 4294901760
        %1077 = vmatmul.mubr.f32.gmra.mrb[0].mxu0 %v1076
        %v1078 = vpop.f32.mrb[0].mxu0
        %v1079 = vadd.f32 %v911, %v1078
        %v1080 = vpop.f32.mrb[0].mxu0
        %v1081 = vadd.f32 %v913, %v1080
        %1082 = vdwg.mxu0
        %1083 = vmatprep.subr.mxu0 0.0
        %v1084 = vand.u32 %v237, 4294901760
        %1085 = vmatpush1.xpose.msra.mxu0 %v1084
        %1086 = vmatprep.subr.mxu0 0.0
        %v1087 = vand.u32 %v240, 4294901760
        %1088 = vmatpush1.xpose.msra.mxu0 %v1087
        %1089 = vmatprep.subr.mxu0 0.0
        %v1090 = vand.u32 %v243, 4294901760
        %1091 = vmatpush1.xpose.msra.mxu0 %v1090
        %1092 = vmatprep.subr.mxu0 0.0
        %v1093 = vand.u32 %v246, 4294901760
        %1094 = vmatpush1.xpose.msra.mxu0 %v1093
        %1095 = vmatprep.subr.mxu0 0.0
        %v1096 = vand.u32 %v249, 4294901760
        %1097 = vmatpush1.xpose.msra.mxu0 %v1096
        %1098 = vmatprep.subr.mxu0 0.0
        %v1099 = vand.u32 %v252, 4294901760
        %1100 = vmatpush1.xpose.msra.mxu0 %v1099
        %1101 = vmatprep.subr.mxu0 0.0
        %v1102 = vand.u32 %v255, 4294901760
        %1103 = vmatpush1.xpose.msra.mxu0 %v1102
        %1104 = vmatprep.subr.mxu0 0.0
        %v1105 = vand.u32 %v258, 4294901760
        %1106 = vmatpush1.xpose.msra.mxu0 %v1105
        %1107 = vmatprep.subr.mxu0 0.0
        %v1108 = vand.u32 %v261, 4294901760
        %1109 = vmatpush1.xpose.msra.mxu0 %v1108
        %1110 = vmatprep.subr.mxu0 0.0
        %v1111 = vand.u32 %v264, 4294901760
        %1112 = vmatpush1.xpose.msra.mxu0 %v1111
        %1113 = vmatprep.subr.mxu0 0.0
        %v1114 = vand.u32 %v267, 4294901760
        %1115 = vmatpush1.xpose.msra.mxu0 %v1114
        %1116 = vmatprep.subr.mxu0 0.0
        %v1117 = vand.u32 %v270, 4294901760
        %1118 = vmatpush1.xpose.msra.mxu0 %v1117
        %1119 = vmatprep.subr.mxu0 0.0
        %v1120 = vand.u32 %v273, 4294901760
        %1121 = vmatpush1.xpose.msra.mxu0 %v1120
        %1122 = vmatprep.subr.mxu0 0.0
        %v1123 = vand.u32 %v276, 4294901760
        %1124 = vmatpush1.xpose.msra.mxu0 %v1123
        %1125 = vmatprep.subr.mxu0 0.0
        %v1126 = vand.u32 %v279, 4294901760
        %1127 = vmatpush1.xpose.msra.mxu0 %v1126
        %1128 = vmatprep.subr.mxu0 0.0
        %v1129 = vand.u32 %v282, 4294901760
        %1130 = vmatpush1.xpose.msra.mxu0 %v1129
        %1131 = vmatprep.subr.mxu0 0.0
        %v1132 = vand.u32 %v285, 4294901760
        %1133 = vmatpush1.xpose.msra.mxu0 %v1132
        %1134 = vmatprep.subr.mxu0 0.0
        %v1135 = vand.u32 %v288, 4294901760
        %1136 = vmatpush1.xpose.msra.mxu0 %v1135
        %1137 = vmatprep.subr.mxu0 0.0
        %v1138 = vand.u32 %v291, 4294901760
        %1139 = vmatpush1.xpose.msra.mxu0 %v1138
        %1140 = vmatprep.subr.mxu0 0.0
        %v1141 = vand.u32 %v294, 4294901760
        %1142 = vmatpush1.xpose.msra.mxu0 %v1141
        %1143 = vmatprep.subr.mxu0 0.0
        %v1144 = vand.u32 %v297, 4294901760
        %1145 = vmatpush1.xpose.msra.mxu0 %v1144
        %1146 = vmatprep.subr.mxu0 0.0
        %v1147 = vand.u32 %v300, 4294901760
        %1148 = vmatpush1.xpose.msra.mxu0 %v1147
        %1149 = vmatprep.subr.mxu0 0.0
        %v1150 = vand.u32 %v303, 4294901760
        %1151 = vmatpush1.xpose.msra.mxu0 %v1150
        %1152 = vmatprep.subr.mxu0 0.0
        %v1153 = vand.u32 %v306, 4294901760
        %1154 = vmatpush1.xpose.msra.mxu0 %v1153
        %1155 = vmatprep.subr.mxu0 0.0
        %v1156 = vand.u32 %v309, 4294901760
        %1157 = vmatpush1.xpose.msra.mxu0 %v1156
        %1158 = vmatprep.subr.mxu0 0.0
        %v1159 = vand.u32 %v312, 4294901760
        %1160 = vmatpush1.xpose.msra.mxu0 %v1159
        %1161 = vmatprep.subr.mxu0 0.0
        %v1162 = vand.u32 %v315, 4294901760
        %1163 = vmatpush1.xpose.msra.mxu0 %v1162
        %1164 = vmatprep.subr.mxu0 0.0
        %v1165 = vand.u32 %v318, 4294901760
        %1166 = vmatpush1.xpose.msra.mxu0 %v1165
        %1167 = vmatprep.subr.mxu0 0.0
        %v1168 = vand.u32 %v321, 4294901760
        %1169 = vmatpush1.xpose.msra.mxu0 %v1168
        %1170 = vmatprep.subr.mxu0 0.0
        %v1171 = vand.u32 %v324, 4294901760
        %1172 = vmatpush1.xpose.msra.mxu0 %v1171
        %1173 = vmatprep.subr.mxu0 0.0
        %v1174 = vand.u32 %v327, 4294901760
        %1175 = vmatpush1.xpose.msra.mxu0 %v1174
        %1176 = vmatprep.subr.mxu0 0.0
        %v1177 = vand.u32 %v330, 4294901760
        %1178 = vmatpush1.xpose.msra.mxu0 %v1177
        %1179 = vmatprep.mubr.f32.mxu0 0.0
        %v1180 = vand.u32 %v234, 4294901760
        %1181 = vmatmul.mubr.f32.gmra.mrb[0].mxu0 %v1180
        %v1182 = vpop.f32.mrb[0].mxu0
        %v1183 = vadd.f32 %v1079, %v1182
        %v1184 = vpop.f32.mrb[0].mxu0
        %v1185 = vadd.f32 %v1081, %v1184
        %1186 = vdwg.mxu0
        %v1187 = vxor.u32 %v1183, 2147483648
        %v1188 = vxor.u32 %v1185, 2147483648
        %v1189 = vmul.f32 %v1187, 1.442695
        %v1190 = vpow.pop %v1189
        %v1191 = vmul.f32 %v1188, 1.442695
        %v1192 = vpow.pop %v1191
        %v1193 = vadd.f32 %v1190, 1.0
        %v1194 = vadd.f32 %v1192, 1.0
        %v1195 = vrcp.pop %v1193
        %v1196 = vmul.f32 1.0, %v1195
        %v1197 = vrcp.pop %v1194
        %v1198 = vmul.f32 1.0, %v1197
        %v1201 = vcombine.low %v1196, %v1198
        %v1203 = vunpack.c.l.s4 1966171168
        %v1204 = vunpack.c.0.s8 %v1203
        %v1205 = vlaneseq
        %v1206 = vshrl.u32 %v1205, 7
        %v1207 = vsub.s32 %v1204, %v1206
        %v1208 = vrot.slane %v1201, %v1207
        %v1210 = vunpack.c.l.s4 1966171168
        %v1211 = vunpack.c.0.s8 %v1210
        %v1212 = vlaneseq
        %v1213 = vshrl.u32 %v1212, 7
        %v1214 = vsub.s32 %v1211, %v1213
        %v1215 = vrot.slane %v1208, %v1214
        %v1217 = vlaneseq
        %vm1218 = vcmp.ge.s32.totalorder %v1217, 0
        %vm1219 = vcmp.lt.s32.totalorder %v1217, 256
        %vm1220 = vmand %vm1218, %vm1219
        %1221 = vst.msk [vmem:[%s177] sm:$0x3] %vm1220, %v1215
        %s1222 = sand.u32 %s94, 1
        %s1223 = scalar_lea.sflag [#allocation4], %s1222
        %s1224 = sand.u32 %s94, 1
        %s1225 = smul.addr %s1224, 2
        %s1226 = scalar_lea.vmem [#allocation3], %s1225
        // Predicated region
        $region33: #{tpu_custom_call.1} parent=31 // pred_check
          %p1227 = pneg %p104
        $region34: #{tpu_custom_call.1} parent=31 // pred_check_branch
          %1229 = sbr.rel (%p1227) target = $region36
        $region35: #{tpu_custom_call.1} parent=31 // pred_region
          %s1230 = smul.u32 2, %s18
          %s1231 = ssub.s32 3, %s1230
          %p1232 = scmp.lt.s32.totalorder %s1231, 2
          %s1233 = scalar_select %p1232, %s1231, 2
          %s1234 = smul.u32 16, %s1233
          %s1236 = ssub.s32 32, %s1234
          %1237 = vsyncadd %s1223, %s1236
          %p1238 = scmp.ne.s32.totalorder 0, %s1234
          %s1239 = smul.addr %s1230, 16
          %s1240 = scalar_lea.hbm %s3, %s1239
          %s1241 = sshll.u32 %s1233, 4
          %s1242 = sshll.u32 %s1226, 4
          %s1243 = int_to_ptr.vmem [resolvable:$true] %s1242
          %1245 = dma.vmem_to_hbm [thread:$0]  (%p1238), %s1243, %s1241, %s1240, %s1223
        $region36: #{tpu_custom_call.1} parent=31 // pred_fallthru
          _
      $region32: #{tpu_custom_call.1} parent=5 // pred_fallthru
        _
      %p1246 = scmp.le.s32.totalorder 2, %s13
      // Predicated region
      $region37: #{tpu_custom_call.1} parent=5 // pred_check
        %p1247 = pneg %p1246
      $region38: #{tpu_custom_call.1} parent=5 // pred_check_branch
        %1249 = sbr.rel (%p1247) target = $region40
      $region39: #{tpu_custom_call.1} parent=5 // pred_region
        %s1250 = ssub.s32 %s13, 2
        // Predicated region
        $region41: #{tpu_custom_call.1} parent=39 // pred_check
          %p1251 = pneg %p110
        $region42: #{tpu_custom_call.1} parent=39 // pred_check_branch
          %1253 = sbr.rel (%p1251) target = $region44
        $region43: #{tpu_custom_call.1} parent=39 // pred_region
          %s1254 = sand.u32 %s95, 1
          %s1255 = scalar_lea.sflag [#allocation4], %s1254
          %s1256 = sand.u32 %s95, 1
          %s1257 = smul.addr %s1256, 2
          %s1258 = scalar_lea.vmem [#allocation3], %s1257
          %1259 = dma.done %s1255, 32
        $region44: #{tpu_custom_call.1} parent=39 // pred_fallthru
          _
      $region40: #{tpu_custom_call.1} parent=5 // pred_fallthru
        _
    $region6: #{tpu_custom_call.1} parent=1 // loop_footer
      %s17 = sadd.s32 1, %s13
    $region7: #{tpu_custom_call.1} parent=1 // loop_footer_branch
      %12 = sbr.rel target = $region3
    $region8: #{tpu_custom_call.1} parent=1 // loop_exit
      _
    %1260 = vsyncpa [#allocation4], 1
    %s1261 = scalar_lea.sflag [#allocation4], 1
    %1262 = vsyncpa %s1261, 1

</llo_original>
